<compile_context>
chip_gen: v5e
topology: v5e:2x2
jax: 0.10.0
libtpu: 0.0.40
codegen_flags: <defaults>
</compile_context>

<pallas_src>
import jax
import jax.numpy as jnp
from jax.experimental import pallas as pl
from jax.experimental.pallas import tpu as pltpu

LANE = 128


def _round_up(x, m):
    return (x + m - 1) // m * m


def _make_kernel(E, TB, S):
    inv_s = 1.0 / float(S)

    def kernel(wid_ref, bid_ref, tid_ref,          # scalar-prefetch ids (SMEM)
               ew_ref, eb_ref, et_ref,             # gathered rows, each (1, 1, E)
               w1_ref, b1_ref, w2_ref, b2_ref,     # VMEM-resident weights
               out_ref,                            # (TB, C_pad)
               acc_w, acc_b, acc_t):               # VMEM scratch, each (TB, E)
        del wid_ref, bid_ref, tid_ref              # only used by index_maps
        r = pl.program_id(1)   # row within the batch tile
        s = pl.program_id(2)   # token position within the sequence

        # Reset the per-tile accumulators at the start of each batch tile.
        @pl.when(jnp.logical_and(r == 0, s == 0))
        def _():
            acc_w[...] = jnp.zeros_like(acc_w)
            acc_b[...] = jnp.zeros_like(acc_b)
            acc_t[...] = jnp.zeros_like(acc_t)

        # Accumulate this token's embedding rows into row `r` of the tile
        # accumulators via a one-hot row mask (avoids dynamic sublane stores).
        row_sel = (jax.lax.broadcasted_iota(jnp.int32, (TB, 1), 0) == r
                   ).astype(jnp.float32)
        acc_w[...] += row_sel * ew_ref[0]
        acc_b[...] += row_sel * eb_ref[0]
        acc_t[...] += row_sel * et_ref[0]

        # Last (row, token) of the tile: mean -> fc1 -> relu -> fc2 -> store.
        @pl.when(jnp.logical_and(r == TB - 1, s == S - 1))
        def _():
            mw = acc_w[...] * inv_s
            mb = acc_b[...] * inv_s
            mt = acc_t[...] * inv_s
            # concat([mw, mb, mt], -1) @ W1  ==  split-K matmul on pre-split W1.
            h = (jnp.dot(mw, w1_ref[0], preferred_element_type=jnp.float32)
                 + jnp.dot(mb, w1_ref[1], preferred_element_type=jnp.float32)
                 + jnp.dot(mt, w1_ref[2], preferred_element_type=jnp.float32)
                 + b1_ref[...])
            h = jnp.maximum(h, 0.0)
            out = (jnp.dot(h, w2_ref[...], preferred_element_type=jnp.float32)
                   + b2_ref[...])
            out_ref[...] = out.astype(out_ref.dtype)

    return kernel


def fasttext_forward(word_ids, bigram_ids, trigram_ids, params, *, batch_tile=128):
    """word_ids/bigram_ids/trigram_ids: int32 (B, S). Returns (B, num_classes) f32."""
    emb_w = params["emb_word"]      # (vocab, E)
    emb_b = params["emb_bigram"]    # (ngram_vocab, E)
    emb_t = params["emb_trigram"]   # (ngram_vocab, E)
    w1, b1 = params["w1"], params["b1"]   # (3E, H), (1, H)
    w2, b2 = params["w2"], params["b2"]   # (H, C), (1, C)

    B, S = word_ids.shape
    E = emb_w.shape[1]
    H = w1.shape[1]
    C = w2.shape[1]

    H_pad = _round_up(H, LANE)
    C_pad = _round_up(C, LANE)
    TB = min(batch_tile, _round_up(B, 8))
    B_pad = _round_up(B, TB)
    nbt = B_pad // TB

    # Pad ids to the tiled batch (padded rows gather row 0; sliced off below).
    def pad_ids(ids):
        return jnp.pad(ids.astype(jnp.int32), ((0, B_pad - B), (0, 0)))

    wid = pad_ids(word_ids)
    bid = pad_ids(bigram_ids)
    tid = pad_ids(trigram_ids)

    # Tables as (V, 1, E) so the per-token gather block is (1, 1, E).
    ew3 = emb_w[:, None, :]
    eb3 = emb_b[:, None, :]
    et3 = emb_t[:, None, :]

    # Pre-split and lane-pad the MLP weights (zero padding is exact).
    w1p = jnp.pad(w1.reshape(3, E, H), ((0, 0), (0, 0), (0, H_pad - H)))
    b1p = jnp.pad(b1, ((0, 0), (0, H_pad - H)))
    w2p = jnp.pad(w2, ((0, H_pad - H), (0, C_pad - C)))
    b2p = jnp.pad(b2, ((0, 0), (0, C_pad - C)))

    kernel = _make_kernel(E, TB, S)

    # index_maps: (grid idx i, r, s, then the 3 scalar-prefetch refs)
    word_map = lambda i, r, s, w_ids, b_ids, t_ids: (w_ids[i * TB + r, s], 0, 0)
    bigram_map = lambda i, r, s, w_ids, b_ids, t_ids: (b_ids[i * TB + r, s], 0, 0)
    trigram_map = lambda i, r, s, w_ids, b_ids, t_ids: (t_ids[i * TB + r, s], 0, 0)
    const3 = lambda i, r, s, w_ids, b_ids, t_ids: (0, 0, 0)
    const2 = lambda i, r, s, w_ids, b_ids, t_ids: (0, 0)
    out_map = lambda i, r, s, w_ids, b_ids, t_ids: (i, 0)

    grid_spec = pltpu.PrefetchScalarGridSpec(
        num_scalar_prefetch=3,
        grid=(nbt, TB, S),
        in_specs=[
            pl.BlockSpec((1, 1, E), word_map),
            pl.BlockSpec((1, 1, E), bigram_map),
            pl.BlockSpec((1, 1, E), trigram_map),
            pl.BlockSpec((3, E, H_pad), const3),
            pl.BlockSpec((1, H_pad), const2),
            pl.BlockSpec((H_pad, C_pad), const2),
            pl.BlockSpec((1, C_pad), const2),
        ],
        out_specs=pl.BlockSpec((TB, C_pad), out_map),
        scratch_shapes=[pltpu.VMEM((TB, E), jnp.float32)] * 3,
    )

    out = pl.pallas_call(
        kernel,
        out_shape=jax.ShapeDtypeStruct((B_pad, C_pad), jnp.float32),
        grid_spec=grid_spec,
        compiler_params=pltpu.CompilerParams(
            dimension_semantics=("parallel", "arbitrary", "arbitrary"),
            vmem_limit_bytes=32 * 1024 * 1024,
        ),
    )(wid, bid, tid, ew3, eb3, et3, w1p, b1p, w2p, b2p)

    return out[:B, :C]


def init_params(key, vocab_size, ngram_vocab, embed, hidden, num_classes):
    ks = jax.random.split(key, 7)
    scale = 0.1
    emb_word = scale * jax.random.normal(ks[0], (vocab_size, embed), jnp.float32)
    # padding_idx=0 -> zero row (matches nn.Embedding(padding_idx=0) init)
    emb_word = emb_word.at[0].set(0.0)
    emb_bigram = scale * jax.random.normal(ks[1], (ngram_vocab, embed), jnp.float32)
    emb_trigram = scale * jax.random.normal(ks[2], (ngram_vocab, embed), jnp.float32)
    w1 = scale * jax.random.normal(ks[3], (embed * 3, hidden), jnp.float32)
    b1 = scale * jax.random.normal(ks[4], (1, hidden), jnp.float32)
    w2 = scale * jax.random.normal(ks[5], (hidden, num_classes), jnp.float32)
    b2 = scale * jax.random.normal(ks[6], (1, num_classes), jnp.float32)
    return dict(emb_word=emb_word, emb_bigram=emb_bigram, emb_trigram=emb_trigram,
                w1=w1, b1=b1, w2=w2, b2=b2)


def reference_forward(word_ids, bigram_ids, trigram_ids, params):
    """Pure-JAX reference of the same forward (for sanity check)."""
    ew = jnp.take(params["emb_word"], word_ids, axis=0)
    eb = jnp.take(params["emb_bigram"], bigram_ids, axis=0)
    et = jnp.take(params["emb_trigram"], trigram_ids, axis=0)
    feat = jnp.mean(jnp.concatenate([ew, eb, et], axis=-1), axis=1)
    h = jnp.maximum(feat @ params["w1"] + params["b1"], 0.0)
    return h @ params["w2"] + params["b2"]


if __name__ == "__main__":
    B, S, E, H = 8, 8, 32, 32
    VOCAB, NGRAM_VOCAB, NUM_CLASSES = 100, 100, 8

    key = jax.random.PRNGKey(0)
    kp, kw, kb, kt = jax.random.split(key, 4)
    params = init_params(kp, VOCAB, NGRAM_VOCAB, E, H, NUM_CLASSES)

    word_ids = jax.random.randint(kw, (B, S), 0, VOCAB, dtype=jnp.int32)
    bigram_ids = jax.random.randint(kb, (B, S), 0, NGRAM_VOCAB, dtype=jnp.int32)
    trigram_ids = jax.random.randint(kt, (B, S), 0, NGRAM_VOCAB, dtype=jnp.int32)

    out = fasttext_forward(word_ids, bigram_ids, trigram_ids, params)
    out = jax.block_until_ready(out)

    ref = reference_forward(word_ids, bigram_ids, trigram_ids, params)
    assert out.shape == (B, NUM_CLASSES)
    assert jnp.allclose(out, ref, atol=1e-4, rtol=1e-4), "mismatch vs JAX reference"

    # TODO(synk): dropout is identity (inference); training-mode dropout would
    # need pltpu.prng_seed/prng_random_bits in the final pl.when block.
    print("KERNEL_OK")
</pallas_src>

<mosaic_0001>
module attributes {stable_mosaic.version = 11 : i64} {
  func.func @kernel(%arg0: i32, %arg1: i32, %arg2: i32, %arg3: memref<8x8xi32, #tpu.memory_space<smem>>, %arg4: memref<8x8xi32, #tpu.memory_space<smem>>, %arg5: memref<8x8xi32, #tpu.memory_space<smem>>, %arg6: memref<1x1x32xf32, #tpu.memory_space<vmem>>, %arg7: memref<1x1x32xf32, #tpu.memory_space<vmem>>, %arg8: memref<1x1x32xf32, #tpu.memory_space<vmem>>, %arg9: memref<3x32x128xf32, #tpu.memory_space<vmem>>, %arg10: memref<1x128xf32, #tpu.memory_space<vmem>>, %arg11: memref<128x128xf32, #tpu.memory_space<vmem>>, %arg12: memref<1x128xf32, #tpu.memory_space<vmem>>, %arg13: memref<8x128xf32, #tpu.memory_space<vmem>>, %arg14: memref<8x32xf32, #tpu.memory_space<vmem>>, %arg15: memref<8x32xf32, #tpu.memory_space<vmem>>, %arg16: memref<8x32xf32, #tpu.memory_space<vmem>>) attributes {dimension_semantics = [#tpu.dimension_semantics<parallel>, #tpu.dimension_semantics<arbitrary>, #tpu.dimension_semantics<arbitrary>], iteration_bounds = array<i64: 1, 8, 8>, scalar_prefetch = 3 : i64, scratch_operands = 3 : i64, tpu.core_type = #tpu.core_type<tc>, window_params = [{transform_indices = @transform_0, window_bounds = array<i64: 1, 1, 32>}, {transform_indices = @transform_1, window_bounds = array<i64: 1, 1, 32>}, {transform_indices = @transform_2, window_bounds = array<i64: 1, 1, 32>}, {pipeline_mode = #tpu.pipeline_mode<synchronous>, transform_indices = @transform_3, window_bounds = array<i64: 3, 32, 128>}, {pipeline_mode = #tpu.pipeline_mode<synchronous>, transform_indices = @transform_4, window_bounds = array<i64: 1, 128>}, {pipeline_mode = #tpu.pipeline_mode<synchronous>, transform_indices = @transform_5, window_bounds = array<i64: 128, 128>}, {pipeline_mode = #tpu.pipeline_mode<synchronous>, transform_indices = @transform_6, window_bounds = array<i64: 1, 128>}, {transform_indices = @transform_7, window_bounds = array<i64: 8, 128>}]} {
    %c0_i32 = arith.constant 0 : i32
    %0 = arith.cmpi eq, %arg1, %c0_i32 : i32
    %c0_i32_0 = arith.constant 0 : i32
    %1 = arith.cmpi eq, %arg2, %c0_i32_0 : i32
    %2 = arith.andi %0, %1 : i1
    %3 = arith.extui %2 : i1 to i32
    %c0_i32_1 = arith.constant 0 : i32
    %4 = arith.cmpi ne, %3, %c0_i32_1 : i32
    scf.if %4 {
      %cst = arith.constant 0.000000e+00 : f32
      %39 = vector.broadcast %cst : f32 to vector<8x32xf32>
      %c0_24 = arith.constant 0 : index
      %c0_25 = arith.constant 0 : index
      %40 = vector.load %arg14[%c0_24, %c0_25] : memref<8x32xf32, #tpu.memory_space<vmem>>, vector<8x32xf32>
      tpu.vector_store %arg14[%c0_24, %c0_25], %39 {strides = array<i32>} : memref<8x32xf32, #tpu.memory_space<vmem>>, vector<8x32xf32>,
      %cst_26 = arith.constant 0.000000e+00 : f32
      %41 = vector.broadcast %cst_26 : f32 to vector<8x32xf32>
      %c0_27 = arith.constant 0 : index
      %c0_28 = arith.constant 0 : index
      %42 = vector.load %arg15[%c0_27, %c0_28] : memref<8x32xf32, #tpu.memory_space<vmem>>, vector<8x32xf32>
      tpu.vector_store %arg15[%c0_27, %c0_28], %41 {strides = array<i32>} : memref<8x32xf32, #tpu.memory_space<vmem>>, vector<8x32xf32>,
      %cst_29 = arith.constant 0.000000e+00 : f32
      %43 = vector.broadcast %cst_29 : f32 to vector<8x32xf32>
      %c0_30 = arith.constant 0 : index
      %c0_31 = arith.constant 0 : index
      %44 = vector.load %arg16[%c0_30, %c0_31] : memref<8x32xf32, #tpu.memory_space<vmem>>, vector<8x32xf32>
      tpu.vector_store %arg16[%c0_30, %c0_31], %43 {strides = array<i32>} : memref<8x32xf32, #tpu.memory_space<vmem>>, vector<8x32xf32>,
    } else {
    }
    %5 = tpu.iota {dimensions = array<i32: 0>} : vector<8x1xi32>
    %6 = vector.broadcast %arg1 : i32 to vector<8x1xi32>
    %7 = arith.cmpi eq, %5, %6 : vector<8x1xi32>
    %8 = arith.extui %7 : vector<8x1xi1> to vector<8x1xi32>
    %9 = arith.sitofp %8 : vector<8x1xi32> to vector<8x1xf32>
    %c0 = arith.constant 0 : index
    %c0_2 = arith.constant 0 : index
    %10 = vector.load %arg14[%c0, %c0_2] : memref<8x32xf32, #tpu.memory_space<vmem>>, vector<8x32xf32>
    %c0_3 = arith.constant 0 : index
    %c0_4 = arith.constant 0 : index
    %c0_5 = arith.constant 0 : index
    %11 = vector.load %arg6[%c0_3, %c0_4, %c0_5] : memref<1x1x32xf32, #tpu.memory_space<vmem>>, vector<1x1x32xf32>
    %12 = vector.shape_cast %11 : vector<1x1x32xf32> to vector<1x32xf32>
    %13 = vector.broadcast %9 : vector<8x1xf32> to vector<8x32xf32>
    %14 = vector.broadcast %12 : vector<1x32xf32> to vector<8x32xf32>
    %15 = arith.mulf %13, %14 : vector<8x32xf32>
    %16 = arith.addf %10, %15 : vector<8x32xf32>
    %c0_6 = arith.constant 0 : index
    %c0_7 = arith.constant 0 : index
    %17 = vector.load %arg14[%c0_6, %c0_7] : memref<8x32xf32, #tpu.memory_space<vmem>>, vector<8x32xf32>
    tpu.vector_store %arg14[%c0_6, %c0_7], %16 {strides = array<i32>} : memref<8x32xf32, #tpu.memory_space<vmem>>, vector<8x32xf32>,
    %c0_8 = arith.constant 0 : index
    %c0_9 = arith.constant 0 : index
    %18 = vector.load %arg15[%c0_8, %c0_9] : memref<8x32xf32, #tpu.memory_space<vmem>>, vector<8x32xf32>
    %c0_10 = arith.constant 0 : index
    %c0_11 = arith.constant 0 : index
    %c0_12 = arith.constant 0 : index
    %19 = vector.load %arg7[%c0_10, %c0_11, %c0_12] : memref<1x1x32xf32, #tpu.memory_space<vmem>>, vector<1x1x32xf32>
    %20 = vector.shape_cast %19 : vector<1x1x32xf32> to vector<1x32xf32>
    %21 = vector.broadcast %9 : vector<8x1xf32> to vector<8x32xf32>
    %22 = vector.broadcast %20 : vector<1x32xf32> to vector<8x32xf32>
    %23 = arith.mulf %21, %22 : vector<8x32xf32>
    %24 = arith.addf %18, %23 : vector<8x32xf32>
    %c0_13 = arith.constant 0 : index
    %c0_14 = arith.constant 0 : index
    %25 = vector.load %arg15[%c0_13, %c0_14] : memref<8x32xf32, #tpu.memory_space<vmem>>, vector<8x32xf32>
    tpu.vector_store %arg15[%c0_13, %c0_14], %24 {strides = array<i32>} : memref<8x32xf32, #tpu.memory_space<vmem>>, vector<8x32xf32>,
    %c0_15 = arith.constant 0 : index
    %c0_16 = arith.constant 0 : index
    %26 = vector.load %arg16[%c0_15, %c0_16] : memref<8x32xf32, #tpu.memory_space<vmem>>, vector<8x32xf32>
    %c0_17 = arith.constant 0 : index
    %c0_18 = arith.constant 0 : index
    %c0_19 = arith.constant 0 : index
    %27 = vector.load %arg8[%c0_17, %c0_18, %c0_19] : memref<1x1x32xf32, #tpu.memory_space<vmem>>, vector<1x1x32xf32>
    %28 = vector.shape_cast %27 : vector<1x1x32xf32> to vector<1x32xf32>
    %29 = vector.broadcast %9 : vector<8x1xf32> to vector<8x32xf32>
    %30 = vector.broadcast %28 : vector<1x32xf32> to vector<8x32xf32>
    %31 = arith.mulf %29, %30 : vector<8x32xf32>
    %32 = arith.addf %26, %31 : vector<8x32xf32>
    %c0_20 = arith.constant 0 : index
    %c0_21 = arith.constant 0 : index
    %33 = vector.load %arg16[%c0_20, %c0_21] : memref<8x32xf32, #tpu.memory_space<vmem>>, vector<8x32xf32>
    tpu.vector_store %arg16[%c0_20, %c0_21], %32 {strides = array<i32>} : memref<8x32xf32, #tpu.memory_space<vmem>>, vector<8x32xf32>,
    %c7_i32 = arith.constant 7 : i32
    %34 = arith.cmpi eq, %arg1, %c7_i32 : i32
    %c7_i32_22 = arith.constant 7 : i32
    %35 = arith.cmpi eq, %arg2, %c7_i32_22 : i32
    %36 = arith.andi %34, %35 : i1
    %37 = arith.extui %36 : i1 to i32
    %c0_i32_23 = arith.constant 0 : i32
    %38 = arith.cmpi ne, %37, %c0_i32_23 : i32
    scf.if %38 {
      %c0_24 = arith.constant 0 : index
      %c0_25 = arith.constant 0 : index
      %39 = vector.load %arg14[%c0_24, %c0_25] : memref<8x32xf32, #tpu.memory_space<vmem>>, vector<8x32xf32>
      %cst = arith.constant 1.250000e-01 : f32
      %40 = vector.broadcast %cst : f32 to vector<8x32xf32>
      %41 = arith.mulf %39, %40 : vector<8x32xf32>
      %c0_26 = arith.constant 0 : index
      %c0_27 = arith.constant 0 : index
      %42 = vector.load %arg15[%c0_26, %c0_27] : memref<8x32xf32, #tpu.memory_space<vmem>>, vector<8x32xf32>
      %cst_28 = arith.constant 1.250000e-01 : f32
      %43 = vector.broadcast %cst_28 : f32 to vector<8x32xf32>
      %44 = arith.mulf %42, %43 : vector<8x32xf32>
      %c0_29 = arith.constant 0 : index
      %c0_30 = arith.constant 0 : index
      %45 = vector.load %arg16[%c0_29, %c0_30] : memref<8x32xf32, #tpu.memory_space<vmem>>, vector<8x32xf32>
      %cst_31 = arith.constant 1.250000e-01 : f32
      %46 = vector.broadcast %cst_31 : f32 to vector<8x32xf32>
      %47 = arith.mulf %45, %46 : vector<8x32xf32>
      %c0_32 = arith.constant 0 : index
      %c0_33 = arith.constant 0 : index
      %c0_34 = arith.constant 0 : index
      %48 = vector.load %arg9[%c0_32, %c0_33, %c0_34] : memref<3x32x128xf32, #tpu.memory_space<vmem>>, vector<1x32x128xf32>
      %49 = vector.shape_cast %48 : vector<1x32x128xf32> to vector<32x128xf32>
      %cst_35 = arith.constant dense<0.000000e+00> : vector<8x128xf32>
      %50 = tpu.matmul %41, %49, %cst_35 {dimension_numbers = #tpu.dot_dimension_numbers<[1], [0], [0], [1], [0, 0, 1, 1], [], []>} : vector<8x32xf32>, vector<32x128xf32>, vector<8x128xf32> -> vector<8x128xf32>
      %c1 = arith.constant 1 : index
      %c0_36 = arith.constant 0 : index
      %c0_37 = arith.constant 0 : index
      %51 = vector.load %arg9[%c1, %c0_36, %c0_37] : memref<3x32x128xf32, #tpu.memory_space<vmem>>, vector<1x32x128xf32>
      %52 = vector.shape_cast %51 : vector<1x32x128xf32> to vector<32x128xf32>
      %cst_38 = arith.constant dense<0.000000e+00> : vector<8x128xf32>
      %53 = tpu.matmul %44, %52, %cst_38 {dimension_numbers = #tpu.dot_dimension_numbers<[1], [0], [0], [1], [0, 0, 1, 1], [], []>} : vector<8x32xf32>, vector<32x128xf32>, vector<8x128xf32> -> vector<8x128xf32>
      %54 = arith.addf %50, %53 : vector<8x128xf32>
      %c2 = arith.constant 2 : index
      %c0_39 = arith.constant 0 : index
      %c0_40 = arith.constant 0 : index
      %55 = vector.load %arg9[%c2, %c0_39, %c0_40] : memref<3x32x128xf32, #tpu.memory_space<vmem>>, vector<1x32x128xf32>
      %56 = vector.shape_cast %55 : vector<1x32x128xf32> to vector<32x128xf32>
      %cst_41 = arith.constant dense<0.000000e+00> : vector<8x128xf32>
      %57 = tpu.matmul %47, %56, %cst_41 {dimension_numbers = #tpu.dot_dimension_numbers<[1], [0], [0], [1], [0, 0, 1, 1], [], []>} : vector<8x32xf32>, vector<32x128xf32>, vector<8x128xf32> -> vector<8x128xf32>
      %58 = arith.addf %54, %57 : vector<8x128xf32>
      %c0_42 = arith.constant 0 : index
      %c0_43 = arith.constant 0 : index
      %59 = vector.load %arg10[%c0_42, %c0_43] : memref<1x128xf32, #tpu.memory_space<vmem>>, vector<1x128xf32>
      %60 = vector.broadcast %59 : vector<1x128xf32> to vector<8x128xf32>
      %61 = arith.addf %58, %60 : vector<8x128xf32>
      %cst_44 = arith.constant 0.000000e+00 : f32
      %62 = vector.broadcast %cst_44 : f32 to vector<8x128xf32>
      %63 = arith.maximumf %61, %62 : vector<8x128xf32>
      %c0_45 = arith.constant 0 : index
      %c0_46 = arith.constant 0 : index
      %64 = vector.load %arg11[%c0_45, %c0_46] : memref<128x128xf32, #tpu.memory_space<vmem>>, vector<128x128xf32>
      %cst_47 = arith.constant dense<0.000000e+00> : vector<8x128xf32>
      %65 = tpu.matmul %63, %64, %cst_47 {dimension_numbers = #tpu.dot_dimension_numbers<[1], [0], [0], [1], [0, 0, 1, 1], [], []>} : vector<8x128xf32>, vector<128x128xf32>, vector<8x128xf32> -> vector<8x128xf32>
      %c0_48 = arith.constant 0 : index
      %c0_49 = arith.constant 0 : index
      %66 = vector.load %arg12[%c0_48, %c0_49] : memref<1x128xf32, #tpu.memory_space<vmem>>, vector<1x128xf32>
      %67 = vector.broadcast %66 : vector<1x128xf32> to vector<8x128xf32>
      %68 = arith.addf %65, %67 : vector<8x128xf32>
      %c0_50 = arith.constant 0 : index
      %c0_51 = arith.constant 0 : index
      %69 = vector.load %arg13[%c0_50, %c0_51] : memref<8x128xf32, #tpu.memory_space<vmem>>, vector<8x128xf32>
      tpu.vector_store %arg13[%c0_50, %c0_51], %68 {strides = array<i32>} : memref<8x128xf32, #tpu.memory_space<vmem>>, vector<8x128xf32>,
    } else {
    }
    return
  }
  func.func @transform_0(%arg0: i32, %arg1: i32, %arg2: i32, %arg3: memref<8x8xi32, #tpu.memory_space<smem>>, %arg4: memref<8x8xi32, #tpu.memory_space<smem>>, %arg5: memref<8x8xi32, #tpu.memory_space<smem>>) -> (i32, i32, i32) {
    %c8_i32 = arith.constant 8 : i32
    %0 = arith.muli %arg0, %c8_i32 : i32
    %1 = arith.addi %0, %arg1 : i32
    %2 = arith.index_cast %1 : i32 to index
    %3 = arith.index_cast %arg2 : i32 to index
    %4 = memref.load %arg3[%2, %3] : memref<8x8xi32, #tpu.memory_space<smem>>
    %c0_i32 = arith.constant 0 : i32
    %c0_i32_0 = arith.constant 0 : i32
    %c0_i32_1 = arith.constant 0 : i32
    return %4, %c0_i32, %c0_i32_0 : i32, i32, i32
  }
  func.func @transform_1(%arg0: i32, %arg1: i32, %arg2: i32, %arg3: memref<8x8xi32, #tpu.memory_space<smem>>, %arg4: memref<8x8xi32, #tpu.memory_space<smem>>, %arg5: memref<8x8xi32, #tpu.memory_space<smem>>) -> (i32, i32, i32) {
    %c8_i32 = arith.constant 8 : i32
    %0 = arith.muli %arg0, %c8_i32 : i32
    %1 = arith.addi %0, %arg1 : i32
    %2 = arith.index_cast %1 : i32 to index
    %3 = arith.index_cast %arg2 : i32 to index
    %4 = memref.load %arg4[%2, %3] : memref<8x8xi32, #tpu.memory_space<smem>>
    %c0_i32 = arith.constant 0 : i32
    %c0_i32_0 = arith.constant 0 : i32
    %c0_i32_1 = arith.constant 0 : i32
    return %4, %c0_i32, %c0_i32_0 : i32, i32, i32
  }
  func.func @transform_2(%arg0: i32, %arg1: i32, %arg2: i32, %arg3: memref<8x8xi32, #tpu.memory_space<smem>>, %arg4: memref<8x8xi32, #tpu.memory_space<smem>>, %arg5: memref<8x8xi32, #tpu.memory_space<smem>>) -> (i32, i32, i32) {
    %c8_i32 = arith.constant 8 : i32
    %0 = arith.muli %arg0, %c8_i32 : i32
    %1 = arith.addi %0, %arg1 : i32
    %2 = arith.index_cast %1 : i32 to index
    %3 = arith.index_cast %arg2 : i32 to index
    %4 = memref.load %arg5[%2, %3] : memref<8x8xi32, #tpu.memory_space<smem>>
    %c0_i32 = arith.constant 0 : i32
    %c0_i32_0 = arith.constant 0 : i32
    %c0_i32_1 = arith.constant 0 : i32
    return %4, %c0_i32, %c0_i32_0 : i32, i32, i32
  }
  func.func @transform_3(%arg0: i32, %arg1: i32, %arg2: i32, %arg3: memref<8x8xi32, #tpu.memory_space<smem>>, %arg4: memref<8x8xi32, #tpu.memory_space<smem>>, %arg5: memref<8x8xi32, #tpu.memory_space<smem>>) -> (i32, i32, i32) {
    %c0_i32 = arith.constant 0 : i32
    %c0_i32_0 = arith.constant 0 : i32
    %c0_i32_1 = arith.constant 0 : i32
    %c0_i32_2 = arith.constant 0 : i32
    return %c0_i32, %c0_i32_0, %c0_i32_1 : i32, i32, i32
  }
  func.func @transform_4(%arg0: i32, %arg1: i32, %arg2: i32, %arg3: memref<8x8xi32, #tpu.memory_space<smem>>, %arg4: memref<8x8xi32, #tpu.memory_space<smem>>, %arg5: memref<8x8xi32, #tpu.memory_space<smem>>) -> (i32, i32) {
    %c0_i32 = arith.constant 0 : i32
    %c0_i32_0 = arith.constant 0 : i32
    %c0_i32_1 = arith.constant 0 : i32
    return %c0_i32, %c0_i32_0 : i32, i32
  }
  func.func @transform_5(%arg0: i32, %arg1: i32, %arg2: i32, %arg3: memref<8x8xi32, #tpu.memory_space<smem>>, %arg4: memref<8x8xi32, #tpu.memory_space<smem>>, %arg5: memref<8x8xi32, #tpu.memory_space<smem>>) -> (i32, i32) {
    %c0_i32 = arith.constant 0 : i32
    %c0_i32_0 = arith.constant 0 : i32
    %c0_i32_1 = arith.constant 0 : i32
    return %c0_i32, %c0_i32_0 : i32, i32
  }
  func.func @transform_6(%arg0: i32, %arg1: i32, %arg2: i32, %arg3: memref<8x8xi32, #tpu.memory_space<smem>>, %arg4: memref<8x8xi32, #tpu.memory_space<smem>>, %arg5: memref<8x8xi32, #tpu.memory_space<smem>>) -> (i32, i32) {
    %c0_i32 = arith.constant 0 : i32
    %c0_i32_0 = arith.constant 0 : i32
    %c0_i32_1 = arith.constant 0 : i32
    return %c0_i32, %c0_i32_0 : i32, i32
  }
  func.func @transform_7(%arg0: i32, %arg1: i32, %arg2: i32, %arg3: memref<8x8xi32, #tpu.memory_space<smem>>, %arg4: memref<8x8xi32, #tpu.memory_space<smem>>, %arg5: memref<8x8xi32, #tpu.memory_space<smem>>) -> (i32, i32) {
    %c0_i32 = arith.constant 0 : i32
    %c0_i32_0 = arith.constant 0 : i32
    return %arg0, %c0_i32 : i32, i32
  }
}

</mosaic_0001>

<llo_original>
// kernel: tpu_custom_call.1
$region0: #{tpu_custom_call.1}
  #allocation0 [shape = 'u32[]', space=smem, size = 0x4, offset = 0x4, fixed_abs, tag = 'smem constant byte address 0x4 - core index']
  #allocation1 [shape = 'u32[72,128]{1,0:T(1,128)}', space=vmem, size = 0x9000, scoped, tag = 'internal scratch']
  #allocation2 [shape = 'f32[8,32]{1,0:T(8,128)}', space=vmem, size = 0x1000, scoped, tag = 'scratch operand']
  #allocation3 [shape = 'f32[8,32]{1,0:T(8,128)}', space=vmem, size = 0x1000, scoped, tag = 'scratch operand']
  #allocation4 [shape = 'f32[8,32]{1,0:T(8,128)}', space=vmem, size = 0x1000, scoped, tag = 'scratch operand']
  #allocation5 [shape = 's32[1]{0}', space=sflag, size = 0x4, scoped, tag = 'scoped memory for tpu_custom_call.1']
  #allocation6 [shape = 'u8[4096]{0}', space=smem, size = 0x1000, scoped, tag = 'prefetched SMEM operand 0']
  #allocation7 [shape = 'u8[4096]{0}', space=smem, size = 0x1000, scoped, tag = 'prefetched SMEM operand 1']
  #allocation8 [shape = 'u8[4096]{0}', space=smem, size = 0x1000, scoped, tag = 'prefetched SMEM operand 2']
  %s0 = inlined_call_operand.vmem [shape: s32[8,8], index: 0, kind: input, shape index: {}]
  %s1 = inlined_call_operand.vmem [shape: s32[8,8], index: 1, kind: input, shape index: {}]
  %s2 = inlined_call_operand.vmem [shape: s32[8,8], index: 2, kind: input, shape index: {}]
  %s3 = inlined_call_operand.vmem [shape: f32[100,1,32], index: 3, kind: input, shape index: {}]
  %s4 = inlined_call_operand.vmem [shape: f32[100,1,32], index: 4, kind: input, shape index: {}]
  %s5 = inlined_call_operand.vmem [shape: f32[100,1,32], index: 5, kind: input, shape index: {}]
  %s6 = inlined_call_operand.vmem [shape: f32[3,32,128], index: 6, kind: input, shape index: {}]
  %s7 = inlined_call_operand.vmem [shape: f32[1,128], index: 7, kind: input, shape index: {}]
  %s8 = inlined_call_operand.vmem [shape: f32[128,128], index: 8, kind: input, shape index: {}]
  %s9 = inlined_call_operand.vmem [shape: f32[1,128], index: 9, kind: input, shape index: {}]
  %s10 = inlined_call_operand.hbm [shape: f32[8,128], index: 10, kind: output, shape index: {}]
  %s11 = sld [smem:[#allocation0]]
  $region69: #{tpu_custom_call.1} parent=0
    _
  %s13 = ssub.s32 1, %s11
  %s14 = scalar_select 0, %s13, %s11
  %s16 = sshll.u32 %s0, 4
  %s17 = int_to_ptr.vmem [resolvable:$true] %s16
  %19 = dma.vmem_to_smem %s17, 128, [#allocation6], [#allocation5]
  %s21 = sshll.u32 %s1, 4
  %s22 = int_to_ptr.vmem [resolvable:$true] %s21
  %24 = dma.vmem_to_smem %s22, 128, [#allocation7], [#allocation5]
  %s26 = sshll.u32 %s2, 4
  %s27 = int_to_ptr.vmem [resolvable:$true] %s26
  %29 = dma.vmem_to_smem %s27, 128, [#allocation8], [#allocation5]
  %31 = dma.done [#allocation5], 384
  %32 = sfence
  $region1: #{tpu_custom_call.1} parent=0
    #allocation9 [shape = 'u8[4096]{0}', space=vmem, size = 0x1000, scoped, tag = 'output window, operand 0, single buffered']
    #allocation10 [shape = 's32[2]{0}', space=sflag, size = 0x8, scoped, tag = 'scoped memory for tpu_custom_call.1']
    %33 = vsyncpa [#allocation10], 0
    loop: start=0, step=1, limit=66
    $region2: #{tpu_custom_call.1} parent=1 // loop_pre_header
      _
    $region3: #{tpu_custom_call.1} parent=1 // loop_header
      %s35 = sphi 0, %s39
      %p36 = scmp.ge.s32.totalorder %s35, 66
      %s42 = sphi 0, %s61
      %s43 = sphi 0, %s57
      %s44 = sphi 0, %s53
      %s45 = sphi 0, %s42
      %s46 = sphi 0, %s43
      %s47 = sphi 0, %s44
      %s48 = sphi 0, %s45
      %s49 = sphi 0, %s46
      %s50 = sphi 0, %s47
      %s84 = sphi 0, %s86
      %s87 = sphi 0, %s84
      %s88 = sphi 0, %s87
      %s104 = sphi 0, %s88
      %s130 = sphi 0, %s132
      %s133 = sphi 0, %s130
      %s134 = sphi 0, %s133
      %s150 = sphi 0, %s134
      %s176 = sphi 0, %s178
      %s179 = sphi 0, %s176
      %s180 = sphi 0, %s179
      %s196 = sphi 0, %s180
      %s200 = sphi 0, %s200
      %s202 = sphi 0, %s200
      %s203 = sphi 0, %s202
      %s217 = sphi 0, %s203
      %s221 = sphi 0, %s221
      %s223 = sphi 0, %s221
      %s224 = sphi 0, %s223
      %s238 = sphi 0, %s224
      %s242 = sphi 0, %s242
      %s244 = sphi 0, %s242
      %s245 = sphi 0, %s244
      %s259 = sphi 0, %s245
      %s263 = sphi 0, %s263
      %s265 = sphi 0, %s263
      %s266 = sphi 0, %s265
      %s280 = sphi 0, %s266
      %s286 = sphi 0, %s288
      %s289 = sphi 0, %s286
      %s290 = sphi 0, %s289
      %s306 = sphi 0, %s290
    $region4: #{tpu_custom_call.1} parent=1 // loop_header_branch
      %38 = sbr.rel (%p36) target = $region8
    $region5: #{tpu_custom_call.1} parent=1 // loop_body
      %s40 = ssub.s32 %s35, 1
      %s41 = ssub.s32 %s35, 2
      %s51 = sadd.s32 1, %s44
      %p52 = scmp.ge.s32.totalorder %s51, 8
      %s53 = scalar_select %p52, 0, %s51
      %s54 = sadd.s32 1, %s43
      %s55 = scalar_select %p52, %s54, %s43
      %p56 = scmp.ge.s32.totalorder %s55, 8
      %s57 = scalar_select %p56, 0, %s55
      %s58 = sadd.s32 1, %s42
      %s59 = scalar_select %p56, %s58, %s42
      %p60 = scmp.ge.s32.totalorder %s59, 1
      %s61 = scalar_select %p60, 0, %s59
      %s62 = smul.u32 %s42, 8
      %s63 = sadd.s32 %s62, %s43
      %s64 = sshra.s32 %s44, 7
      %s65 = sand.u32 %s44, 127
      %s66 = sadd.s32 %s64, %s63
      %s67 = smul.u32 %s66, 128
      %s68 = sshra.s32 %s44, 7
      %s69 = sand.u32 %s44, 127
      %s70 = sadd.s32 %s67, %s69
      %s71 = sld [smem:[#allocation6 + %s70]]
      %s72 = smul.u32 %s61, 8
      %s73 = sadd.s32 %s72, %s57
      %s74 = sshra.s32 %s53, 7
      %s75 = sand.u32 %s53, 127
      %s76 = sadd.s32 %s74, %s73
      %s77 = smul.u32 %s76, 128
      %s78 = sshra.s32 %s53, 7
      %s79 = sand.u32 %s53, 127
      %s80 = sadd.s32 %s77, %s79
      %s81 = sld [smem:[#allocation6 + %s80]]
      %s82 = ssub.s32 %s71, %s81
      %p83 = scmp.eq.s32.totalorder %s82, 0
      %s85 = sadd.s32 %s84, 1
      %s86 = scalar_select %p83, %s84, %s85
      %p89 = pneg %p83
      %p90 = scmp.eq.s32.totalorder %s35, 63
      %p91 = por %p89, %p90
      %p92 = scmp.ne.s32.totalorder %s84, %s87
      %p93 = scmp.eq.s32.totalorder %s35, 0
      %p94 = por %p92, %p93
      %p95 = scmp.ne.s32.totalorder %s84, %s87
      %p96 = scmp.eq.s32.totalorder %s40, 63
      %p97 = por %p95, %p96
      %p98 = scmp.ne.s32.totalorder %s87, %s88
      %p99 = scmp.eq.s32.totalorder %s40, 0
      %p100 = por %p98, %p99
      %p101 = scmp.ne.s32.totalorder %s87, %s88
      %p102 = scmp.eq.s32.totalorder %s41, 63
      %p103 = por %p101, %p102
      %p105 = scmp.ne.s32.totalorder %s88, %s104
      %p106 = scmp.eq.s32.totalorder %s41, 0
      %p107 = por %p105, %p106
      %s108 = smul.u32 %s42, 8
      %s109 = sadd.s32 %s108, %s43
      %s110 = sshra.s32 %s44, 7
      %s111 = sand.u32 %s44, 127
      %s112 = sadd.s32 %s110, %s109
      %s113 = smul.u32 %s112, 128
      %s114 = sshra.s32 %s44, 7
      %s115 = sand.u32 %s44, 127
      %s116 = sadd.s32 %s113, %s115
      %s117 = sld [smem:[#allocation7 + %s116]]
      %s118 = smul.u32 %s61, 8
      %s119 = sadd.s32 %s118, %s57
      %s120 = sshra.s32 %s53, 7
      %s121 = sand.u32 %s53, 127
      %s122 = sadd.s32 %s120, %s119
      %s123 = smul.u32 %s122, 128
      %s124 = sshra.s32 %s53, 7
      %s125 = sand.u32 %s53, 127
      %s126 = sadd.s32 %s123, %s125
      %s127 = sld [smem:[#allocation7 + %s126]]
      %s128 = ssub.s32 %s117, %s127
      %p129 = scmp.eq.s32.totalorder %s128, 0
      %s131 = sadd.s32 %s130, 1
      %s132 = scalar_select %p129, %s130, %s131
      %p135 = pneg %p129
      %p136 = scmp.eq.s32.totalorder %s35, 63
      %p137 = por %p135, %p136
      %p138 = scmp.ne.s32.totalorder %s130, %s133
      %p139 = scmp.eq.s32.totalorder %s35, 0
      %p140 = por %p138, %p139
      %p141 = scmp.ne.s32.totalorder %s130, %s133
      %p142 = scmp.eq.s32.totalorder %s40, 63
      %p143 = por %p141, %p142
      %p144 = scmp.ne.s32.totalorder %s133, %s134
      %p145 = scmp.eq.s32.totalorder %s40, 0
      %p146 = por %p144, %p145
      %p147 = scmp.ne.s32.totalorder %s133, %s134
      %p148 = scmp.eq.s32.totalorder %s41, 63
      %p149 = por %p147, %p148
      %p151 = scmp.ne.s32.totalorder %s134, %s150
      %p152 = scmp.eq.s32.totalorder %s41, 0
      %p153 = por %p151, %p152
      %s154 = smul.u32 %s42, 8
      %s155 = sadd.s32 %s154, %s43
      %s156 = sshra.s32 %s44, 7
      %s157 = sand.u32 %s44, 127
      %s158 = sadd.s32 %s156, %s155
      %s159 = smul.u32 %s158, 128
      %s160 = sshra.s32 %s44, 7
      %s161 = sand.u32 %s44, 127
      %s162 = sadd.s32 %s159, %s161
      %s163 = sld [smem:[#allocation8 + %s162]]
      %s164 = smul.u32 %s61, 8
      %s165 = sadd.s32 %s164, %s57
      %s166 = sshra.s32 %s53, 7
      %s167 = sand.u32 %s53, 127
      %s168 = sadd.s32 %s166, %s165
      %s169 = smul.u32 %s168, 128
      %s170 = sshra.s32 %s53, 7
      %s171 = sand.u32 %s53, 127
      %s172 = sadd.s32 %s169, %s171
      %s173 = sld [smem:[#allocation8 + %s172]]
      %s174 = ssub.s32 %s163, %s173
      %p175 = scmp.eq.s32.totalorder %s174, 0
      %s177 = sadd.s32 %s176, 1
      %s178 = scalar_select %p175, %s176, %s177
      %p181 = pneg %p175
      %p182 = scmp.eq.s32.totalorder %s35, 63
      %p183 = por %p181, %p182
      %p184 = scmp.ne.s32.totalorder %s176, %s179
      %p185 = scmp.eq.s32.totalorder %s35, 0
      %p186 = por %p184, %p185
      %p187 = scmp.ne.s32.totalorder %s176, %s179
      %p188 = scmp.eq.s32.totalorder %s40, 63
      %p189 = por %p187, %p188
      %p190 = scmp.ne.s32.totalorder %s179, %s180
      %p191 = scmp.eq.s32.totalorder %s40, 0
      %p192 = por %p190, %p191
      %p193 = scmp.ne.s32.totalorder %s179, %s180
      %p194 = scmp.eq.s32.totalorder %s41, 63
      %p195 = por %p193, %p194
      %p197 = scmp.ne.s32.totalorder %s180, %s196
      %p198 = scmp.eq.s32.totalorder %s41, 0
      %p199 = por %p197, %p198
      %s201 = sadd.s32 %s200, 1
      %p204 = scmp.eq.s32.totalorder %s35, 63
      %p205 = scmp.ne.s32.totalorder %s200, %s202
      %p206 = scmp.eq.s32.totalorder %s35, 0
      %p207 = por %p205, %p206
      %p208 = scmp.ne.s32.totalorder %s200, %s202
      %p209 = scmp.eq.s32.totalorder %s40, 63
      %p210 = por %p208, %p209
      %p211 = scmp.ne.s32.totalorder %s202, %s203
      %p212 = scmp.eq.s32.totalorder %s40, 0
      %p213 = por %p211, %p212
      %p214 = scmp.ne.s32.totalorder %s202, %s203
      %p215 = scmp.eq.s32.totalorder %s41, 63
      %p216 = por %p214, %p215
      %p218 = scmp.ne.s32.totalorder %s203, %s217
      %p219 = scmp.eq.s32.totalorder %s41, 0
      %p220 = por %p218, %p219
      %s222 = sadd.s32 %s221, 1
      %p225 = scmp.eq.s32.totalorder %s35, 63
      %p226 = scmp.ne.s32.totalorder %s221, %s223
      %p227 = scmp.eq.s32.totalorder %s35, 0
      %p228 = por %p226, %p227
      %p229 = scmp.ne.s32.totalorder %s221, %s223
      %p230 = scmp.eq.s32.totalorder %s40, 63
      %p231 = por %p229, %p230
      %p232 = scmp.ne.s32.totalorder %s223, %s224
      %p233 = scmp.eq.s32.totalorder %s40, 0
      %p234 = por %p232, %p233
      %p235 = scmp.ne.s32.totalorder %s223, %s224
      %p236 = scmp.eq.s32.totalorder %s41, 63
      %p237 = por %p235, %p236
      %p239 = scmp.ne.s32.totalorder %s224, %s238
      %p240 = scmp.eq.s32.totalorder %s41, 0
      %p241 = por %p239, %p240
      %s243 = sadd.s32 %s242, 1
      %p246 = scmp.eq.s32.totalorder %s35, 63
      %p247 = scmp.ne.s32.totalorder %s242, %s244
      %p248 = scmp.eq.s32.totalorder %s35, 0
      %p249 = por %p247, %p248
      %p250 = scmp.ne.s32.totalorder %s242, %s244
      %p251 = scmp.eq.s32.totalorder %s40, 63
      %p252 = por %p250, %p251
      %p253 = scmp.ne.s32.totalorder %s244, %s245
      %p254 = scmp.eq.s32.totalorder %s40, 0
      %p255 = por %p253, %p254
      %p256 = scmp.ne.s32.totalorder %s244, %s245
      %p257 = scmp.eq.s32.totalorder %s41, 63
      %p258 = por %p256, %p257
      %p260 = scmp.ne.s32.totalorder %s245, %s259
      %p261 = scmp.eq.s32.totalorder %s41, 0
      %p262 = por %p260, %p261
      %s264 = sadd.s32 %s263, 1
      %p267 = scmp.eq.s32.totalorder %s35, 63
      %p268 = scmp.ne.s32.totalorder %s263, %s265
      %p269 = scmp.eq.s32.totalorder %s35, 0
      %p270 = por %p268, %p269
      %p271 = scmp.ne.s32.totalorder %s263, %s265
      %p272 = scmp.eq.s32.totalorder %s40, 63
      %p273 = por %p271, %p272
      %p274 = scmp.ne.s32.totalorder %s265, %s266
      %p275 = scmp.eq.s32.totalorder %s40, 0
      %p276 = por %p274, %p275
      %p277 = scmp.ne.s32.totalorder %s265, %s266
      %p278 = scmp.eq.s32.totalorder %s41, 63
      %p279 = por %p277, %p278
      %p281 = scmp.ne.s32.totalorder %s266, %s280
      %p282 = scmp.eq.s32.totalorder %s41, 0
      %p283 = por %p281, %p282
      %s284 = ssub.s32 %s42, %s61
      %p285 = scmp.eq.s32.totalorder %s284, 0
      %s287 = sadd.s32 %s286, 1
      %s288 = scalar_select %p285, %s286, %s287
      %p291 = pneg %p285
      %p292 = scmp.eq.s32.totalorder %s35, 63
      %p293 = por %p291, %p292
      %p294 = scmp.ne.s32.totalorder %s286, %s289
      %p295 = scmp.eq.s32.totalorder %s35, 0
      %p296 = por %p294, %p295
      %p297 = scmp.ne.s32.totalorder %s286, %s289
      %p298 = scmp.eq.s32.totalorder %s40, 63
      %p299 = por %p297, %p298
      %p300 = scmp.ne.s32.totalorder %s289, %s290
      %p301 = scmp.eq.s32.totalorder %s40, 0
      %p302 = por %p300, %p301
      %p303 = scmp.ne.s32.totalorder %s289, %s290
      %p304 = scmp.eq.s32.totalorder %s41, 63
      %p305 = por %p303, %p304
      %p307 = scmp.ne.s32.totalorder %s290, %s306
      %p308 = scmp.eq.s32.totalorder %s41, 0
      %p309 = por %p307, %p308
      %p310 = scmp.le.s32.totalorder 1, %s35
      %p311 = scmp.lt.s32.totalorder %s35, 65
      %p312 = pnand %p310, %p311
      %p313 = pneg %p312
      // Predicated region
      $region9: #{tpu_custom_call.1} parent=5 // pred_check
        _
      $region10: #{tpu_custom_call.1} parent=5 // pred_check_branch
        %315 = sbr.rel (%p312) target = $region12
      $region11: #{tpu_custom_call.1} parent=5 // pred_region
        %s316 = ssub.s32 %s35, 1
        // Predicated region
        $region13: #{tpu_custom_call.1} parent=11 // pred_check
          %p317 = pneg %p213
        $region14: #{tpu_custom_call.1} parent=11 // pred_check_branch
          %319 = sbr.rel (%p317) target = $region16
        $region15: #{tpu_custom_call.1} parent=11 // pred_region
          _
        $region16: #{tpu_custom_call.1} parent=11 // pred_fallthru
          _
        // Predicated region
        $region17: #{tpu_custom_call.1} parent=11 // pred_check
          %p320 = pneg %p234
        $region18: #{tpu_custom_call.1} parent=11 // pred_check_branch
          %322 = sbr.rel (%p320) target = $region20
        $region19: #{tpu_custom_call.1} parent=11 // pred_region
          _
        $region20: #{tpu_custom_call.1} parent=11 // pred_fallthru
          _
        // Predicated region
        $region21: #{tpu_custom_call.1} parent=11 // pred_check
          %p323 = pneg %p255
        $region22: #{tpu_custom_call.1} parent=11 // pred_check_branch
          %325 = sbr.rel (%p323) target = $region24
        $region23: #{tpu_custom_call.1} parent=11 // pred_region
          _
        $region24: #{tpu_custom_call.1} parent=11 // pred_fallthru
          _
        // Predicated region
        $region25: #{tpu_custom_call.1} parent=11 // pred_check
          %p326 = pneg %p276
        $region26: #{tpu_custom_call.1} parent=11 // pred_check_branch
          %328 = sbr.rel (%p326) target = $region28
        $region27: #{tpu_custom_call.1} parent=11 // pred_region
          _
        $region28: #{tpu_custom_call.1} parent=11 // pred_fallthru
          _
      $region12: #{tpu_custom_call.1} parent=5 // pred_fallthru
        _
      %p329 = scmp.lt.s32.totalorder %s35, 64
      // Predicated region
      $region29: #{tpu_custom_call.1} parent=5 // pred_check
        %p330 = pneg %p329
      $region30: #{tpu_custom_call.1} parent=5 // pred_check_branch
        %332 = sbr.rel (%p330) target = $region32
      $region31: #{tpu_custom_call.1} parent=5 // pred_region
        // Predicated region
        $region33: #{tpu_custom_call.1} parent=31 // pred_check
          %p333 = pneg %p94
        $region34: #{tpu_custom_call.1} parent=31 // pred_check_branch
          %335 = sbr.rel (%p333) target = $region36
        $region35: #{tpu_custom_call.1} parent=31 // pred_region
          %s336 = smul.u32 %s42, 8
          %s337 = sadd.s32 %s336, %s43
          %s338 = sshra.s32 %s44, 7
          %s339 = sand.u32 %s44, 127
          %s340 = sadd.s32 %s338, %s337
          %s341 = smul.u32 %s340, 128
          %s342 = sshra.s32 %s44, 7
          %s343 = sand.u32 %s44, 127
          %s344 = sadd.s32 %s341, %s343
          %s345 = sld [smem:[#allocation6 + %s344]]
          %p346 = scmp.lt.s32.totalorder %s345, 99
          %s347 = scalar_select %p346, %s345, 99
          %s348 = scalar_lea.vmem %s3, %s347
          %s349 = smul.u32 %s42, 8
          %s350 = sadd.s32 %s349, %s43
          %s351 = sshra.s32 %s44, 7
          %s352 = sand.u32 %s44, 127
          %s353 = sadd.s32 %s351, %s350
          %s354 = smul.u32 %s353, 128
          %s355 = sshra.s32 %s44, 7
          %s356 = sand.u32 %s44, 127
          %s357 = sadd.s32 %s354, %s356
          %s358 = sld [smem:[#allocation6 + %s357]]
        $region36: #{tpu_custom_call.1} parent=31 // pred_fallthru
          _
        // Predicated region
        $region37: #{tpu_custom_call.1} parent=31 // pred_check
          %p359 = pneg %p140
        $region38: #{tpu_custom_call.1} parent=31 // pred_check_branch
          %361 = sbr.rel (%p359) target = $region40
        $region39: #{tpu_custom_call.1} parent=31 // pred_region
          %s362 = smul.u32 %s42, 8
          %s363 = sadd.s32 %s362, %s43
          %s364 = sshra.s32 %s44, 7
          %s365 = sand.u32 %s44, 127
          %s366 = sadd.s32 %s364, %s363
          %s367 = smul.u32 %s366, 128
          %s368 = sshra.s32 %s44, 7
          %s369 = sand.u32 %s44, 127
          %s370 = sadd.s32 %s367, %s369
          %s371 = sld [smem:[#allocation7 + %s370]]
          %p372 = scmp.lt.s32.totalorder %s371, 99
          %s373 = scalar_select %p372, %s371, 99
          %s374 = scalar_lea.vmem %s4, %s373
          %s375 = smul.u32 %s42, 8
          %s376 = sadd.s32 %s375, %s43
          %s377 = sshra.s32 %s44, 7
          %s378 = sand.u32 %s44, 127
          %s379 = sadd.s32 %s377, %s376
          %s380 = smul.u32 %s379, 128
          %s381 = sshra.s32 %s44, 7
          %s382 = sand.u32 %s44, 127
          %s383 = sadd.s32 %s380, %s382
          %s384 = sld [smem:[#allocation7 + %s383]]
        $region40: #{tpu_custom_call.1} parent=31 // pred_fallthru
          _
        // Predicated region
        $region41: #{tpu_custom_call.1} parent=31 // pred_check
          %p385 = pneg %p186
        $region42: #{tpu_custom_call.1} parent=31 // pred_check_branch
          %387 = sbr.rel (%p385) target = $region44
        $region43: #{tpu_custom_call.1} parent=31 // pred_region
          %s388 = smul.u32 %s42, 8
          %s389 = sadd.s32 %s388, %s43
          %s390 = sshra.s32 %s44, 7
          %s391 = sand.u32 %s44, 127
          %s392 = sadd.s32 %s390, %s389
          %s393 = smul.u32 %s392, 128
          %s394 = sshra.s32 %s44, 7
          %s395 = sand.u32 %s44, 127
          %s396 = sadd.s32 %s393, %s395
          %s397 = sld [smem:[#allocation8 + %s396]]
          %p398 = scmp.lt.s32.totalorder %s397, 99
          %s399 = scalar_select %p398, %s397, 99
          %s400 = scalar_lea.vmem %s5, %s399
          %s401 = smul.u32 %s42, 8
          %s402 = sadd.s32 %s401, %s43
          %s403 = sshra.s32 %s44, 7
          %s404 = sand.u32 %s44, 127
          %s405 = sadd.s32 %s403, %s402
          %s406 = smul.u32 %s405, 128
          %s407 = sshra.s32 %s44, 7
          %s408 = sand.u32 %s44, 127
          %s409 = sadd.s32 %s406, %s408
          %s410 = sld [smem:[#allocation8 + %s409]]
        $region44: #{tpu_custom_call.1} parent=31 // pred_fallthru
          _
      $region32: #{tpu_custom_call.1} parent=5 // pred_fallthru
        _
      %p411 = scmp.le.s32.totalorder 1, %s35
      %p412 = scmp.lt.s32.totalorder %s35, 65
      %p413 = pnand %p411, %p412
      %p414 = pneg %p413
      // Predicated region
      $region45: #{tpu_custom_call.1} parent=5 // pred_check
        _
      $region46: #{tpu_custom_call.1} parent=5 // pred_check_branch
        %416 = sbr.rel (%p413) target = $region48
      $region47: #{tpu_custom_call.1} parent=5 // pred_region
        %s417 = ssub.s32 %s35, 1
        %s418 = smul.u32 %s45, 8
        %s419 = sadd.s32 %s418, %s46
        %s420 = sshra.s32 %s47, 7
        %s421 = sand.u32 %s47, 127
        %s422 = sadd.s32 %s420, %s419
        %s423 = smul.u32 %s422, 128
        %s424 = sshra.s32 %s47, 7
        %s425 = sand.u32 %s47, 127
        %s426 = sadd.s32 %s423, %s425
        %s427 = sld [smem:[#allocation6 + %s426]]
        %p428 = scmp.lt.s32.totalorder %s427, 99
        %s429 = scalar_select %p428, %s427, 99
        %s430 = scalar_lea.vmem %s3, %s429
        %p431 = pneg %p100
        %p432 = pneg %p97
        %s433 = smul.u32 %s45, 8
        %s434 = sadd.s32 %s433, %s46
        %s435 = sshra.s32 %s47, 7
        %s436 = sand.u32 %s47, 127
        %s437 = sadd.s32 %s435, %s434
        %s438 = smul.u32 %s437, 128
        %s439 = sshra.s32 %s47, 7
        %s440 = sand.u32 %s47, 127
        %s441 = sadd.s32 %s438, %s440
        %s442 = sld [smem:[#allocation7 + %s441]]
        %p443 = scmp.lt.s32.totalorder %s442, 99
        %s444 = scalar_select %p443, %s442, 99
        %s445 = scalar_lea.vmem %s4, %s444
        %p446 = pneg %p146
        %p447 = pneg %p143
        %s448 = smul.u32 %s45, 8
        %s449 = sadd.s32 %s448, %s46
        %s450 = sshra.s32 %s47, 7
        %s451 = sand.u32 %s47, 127
        %s452 = sadd.s32 %s450, %s449
        %s453 = smul.u32 %s452, 128
        %s454 = sshra.s32 %s47, 7
        %s455 = sand.u32 %s47, 127
        %s456 = sadd.s32 %s453, %s455
        %s457 = sld [smem:[#allocation8 + %s456]]
        %p458 = scmp.lt.s32.totalorder %s457, 99
        %s459 = scalar_select %p458, %s457, 99
        %s460 = scalar_lea.vmem %s5, %s459
        %p461 = pneg %p192
        %p462 = pneg %p189
        %p463 = pneg %p213
        %p464 = pneg %p210
        %p465 = pneg %p234
        %p466 = pneg %p231
        %p467 = pneg %p255
        %p468 = pneg %p252
        %p469 = pneg %p276
        %p470 = pneg %p273
        %p471 = pneg %p302
        %p472 = pneg %p299
        %s473 = smul.u32 %s45, 8
        %s474 = sadd.s32 %s473, %s46
        %s475 = sshra.s32 %s47, 7
        %s476 = sand.u32 %s47, 127
        %s477 = sadd.s32 %s475, %s474
        %s478 = smul.u32 %s477, 128
        %s479 = sshra.s32 %s47, 7
        %s480 = sand.u32 %s47, 127
        %s481 = sadd.s32 %s478, %s480
        %s482 = sld [smem:[#allocation6 + %s481]]
        %p483 = scmp.lt.s32.totalorder %s482, 99
        %s484 = scalar_select %p483, %s482, 99
        %s485 = scalar_lea.vmem %s3, %s484
        %s486 = smul.u32 %s45, 8
        %s487 = sadd.s32 %s486, %s46
        %s488 = sshra.s32 %s47, 7
        %s489 = sand.u32 %s47, 127
        %s490 = sadd.s32 %s488, %s487
        %s491 = smul.u32 %s490, 128
        %s492 = sshra.s32 %s47, 7
        %s493 = sand.u32 %s47, 127
        %s494 = sadd.s32 %s491, %s493
        %s495 = sld [smem:[#allocation6 + %s494]]
        %s496 = smul.u32 %s45, 8
        %s497 = sadd.s32 %s496, %s46
        %s498 = sshra.s32 %s47, 7
        %s499 = sand.u32 %s47, 127
        %s500 = sadd.s32 %s498, %s497
        %s501 = smul.u32 %s500, 128
        %s502 = sshra.s32 %s47, 7
        %s503 = sand.u32 %s47, 127
        %s504 = sadd.s32 %s501, %s503
        %s505 = sld [smem:[#allocation7 + %s504]]
        %p506 = scmp.lt.s32.totalorder %s505, 99
        %s507 = scalar_select %p506, %s505, 99
        %s508 = scalar_lea.vmem %s4, %s507
        %s509 = smul.u32 %s45, 8
        %s510 = sadd.s32 %s509, %s46
        %s511 = sshra.s32 %s47, 7
        %s512 = sand.u32 %s47, 127
        %s513 = sadd.s32 %s511, %s510
        %s514 = smul.u32 %s513, 128
        %s515 = sshra.s32 %s47, 7
        %s516 = sand.u32 %s47, 127
        %s517 = sadd.s32 %s514, %s516
        %s518 = sld [smem:[#allocation7 + %s517]]
        %s519 = smul.u32 %s45, 8
        %s520 = sadd.s32 %s519, %s46
        %s521 = sshra.s32 %s47, 7
        %s522 = sand.u32 %s47, 127
        %s523 = sadd.s32 %s521, %s520
        %s524 = smul.u32 %s523, 128
        %s525 = sshra.s32 %s47, 7
        %s526 = sand.u32 %s47, 127
        %s527 = sadd.s32 %s524, %s526
        %s528 = sld [smem:[#allocation8 + %s527]]
        %p529 = scmp.lt.s32.totalorder %s528, 99
        %s530 = scalar_select %p529, %s528, 99
        %s531 = scalar_lea.vmem %s5, %s530
        %s532 = smul.u32 %s45, 8
        %s533 = sadd.s32 %s532, %s46
        %s534 = sshra.s32 %s47, 7
        %s535 = sand.u32 %s47, 127
        %s536 = sadd.s32 %s534, %s533
        %s537 = smul.u32 %s536, 128
        %s538 = sshra.s32 %s47, 7
        %s539 = sand.u32 %s47, 127
        %s540 = sadd.s32 %s537, %s539
        %s541 = sld [smem:[#allocation8 + %s540]]
        %p542 = scmp.eq.s32.totalorder %s46, 0
        %p543 = scmp.eq.s32.totalorder %s47, 0
        %p544 = pnand %p542, %p543
        %p545 = pneg %p544
        // Predicated region
        $region49: #{tpu_custom_call.1} parent=47 // pred_check
          _
        $region50: #{tpu_custom_call.1} parent=47 // pred_check_branch
          %547 = sbr.rel (%p544) target = $region52
        $region51: #{tpu_custom_call.1} parent=47 // pred_region
          %vm548 = vcmask 261120
          %549 = vst.msk [vmem:[#allocation2] sm:$0xff] %vm548, 0.0
          %550 = vst.msk [vmem:[#allocation3] sm:$0xff] %vm548, 0.0
          %551 = vst.msk [vmem:[#allocation4] sm:$0xff] %vm548, 0.0
        $region52: #{tpu_custom_call.1} parent=47 // pred_fallthru
          _
        %v552 = vlaneseq
        %v553 = vshrl.u32 %v552, 7
        %v554 = vstv %s46
        %vm555 = vcmp.eq.s32.totalorder %v553, %v554
        %v556 = vsel %vm555, 1, 0
        %v557 = vcvt.s32.f32 %v556
        %v558 = vld [vmem:[#allocation2] sm:$0xff]
        %v559 = vld [vmem:[%s485] sm:$0x1]
        %v561 = vperm.slane %v559, 0
        %v563 = vmul.f32 %v557, %v561
        %v564 = vadd.f32 %v558, %v563
        %vm565 = vcmask 261120
        %566 = vst.msk [vmem:[#allocation2] sm:$0xff] %vm565, %v564
        %v567 = vld [vmem:[#allocation3] sm:$0xff]
        %v568 = vld [vmem:[%s508] sm:$0x1]
        %v570 = vperm.slane %v568, 0
        %v572 = vmul.f32 %v557, %v570
        %v573 = vadd.f32 %v567, %v572
        %574 = vst.msk [vmem:[#allocation3] sm:$0xff] %vm565, %v573
        %v575 = vld [vmem:[#allocation4] sm:$0xff]
        %v576 = vld [vmem:[%s531] sm:$0x1]
        %v578 = vperm.slane %v576, 0
        %v580 = vmul.f32 %v557, %v578
        %v581 = vadd.f32 %v575, %v580
        %582 = vst.msk [vmem:[#allocation4] sm:$0xff] %vm565, %v581
        %p583 = scmp.eq.s32.totalorder %s46, 7
        %p584 = scmp.eq.s32.totalorder %s47, 7
        %p585 = pnand %p583, %p584
        %p586 = pneg %p585
        // Predicated region
        $region53: #{tpu_custom_call.1} parent=47 // pred_check
          _
        $region54: #{tpu_custom_call.1} parent=47 // pred_check_branch
          %588 = sbr.rel (%p585) target = $region56
        $region55: #{tpu_custom_call.1} parent=47 // pred_region
          %v589 = vld [vmem:[#allocation2] sm:$0xff]
          %v590 = vmul.f32 %v589, 0.125
          %v591 = vld [vmem:[#allocation3] sm:$0xff]
          %v592 = vmul.f32 %v591, 0.125
          %v593 = vld [vmem:[#allocation4] sm:$0xff]
          %v594 = vmul.f32 %v593, 0.125
          %v595 = vld [vmem:[%s6] sm:$0xff]
          %v596 = vld [vmem:[%s6 + $0x8] sm:$0xff]
          %v597 = vld [vmem:[%s6 + $0x10] sm:$0xff]
          %v598 = vld [vmem:[%s6 + $0x18] sm:$0xff]
          %s599 = scalar_lea.vmem %s6, 32
          %v600 = vld [vmem:[%s599] sm:$0xff]
          %v601 = vld [vmem:[%s599 + $0x8] sm:$0xff]
          %v602 = vld [vmem:[%s599 + $0x10] sm:$0xff]
          %v603 = vld [vmem:[%s599 + $0x18] sm:$0xff]
          %v605 = vsel %vm565, %v592, 0
          %607 = vmatpush.msra.mxu0 0.0
          %608 = vmatpush.msra.mxu0 0.0
          %609 = vmatpush.msra.mxu0 0.0
          %610 = vmatpush.msra.mxu0 0.0
          %611 = vmatpush.msra.mxu0 0.0
          %612 = vmatpush.msra.mxu0 0.0
          %613 = vmatpush.msra.mxu0 0.0
          %614 = vmatpush.msra.mxu0 0.0
          %615 = vmatpush.msra.mxu0 0.0
          %616 = vmatpush.msra.mxu0 0.0
          %617 = vmatpush.msra.mxu0 0.0
          %618 = vmatpush.msra.mxu0 0.0
          %619 = vmatpush.msra.mxu0 %v603
          %620 = vmatpush.msra.mxu0 %v602
          %621 = vmatpush.msra.mxu0 %v601
          %622 = vmatpush.msra.mxu0 %v600
          %623 = vmatmul.f32.gmra.mxu0 %v605
          %v624 = vpop.f32.mrf.mxu0
          %v625 = vadd.f32 0.0, %v624
          %626 = vdwg.mxu0
          %v628 = vsel %vm565, %v590, 0
          %630 = vmatpush.msra.mxu0 0.0
          %631 = vmatpush.msra.mxu0 0.0
          %632 = vmatpush.msra.mxu0 0.0
          %633 = vmatpush.msra.mxu0 0.0
          %634 = vmatpush.msra.mxu0 0.0
          %635 = vmatpush.msra.mxu0 0.0
          %636 = vmatpush.msra.mxu0 0.0
          %637 = vmatpush.msra.mxu0 0.0
          %638 = vmatpush.msra.mxu0 0.0
          %639 = vmatpush.msra.mxu0 0.0
          %640 = vmatpush.msra.mxu0 0.0
          %641 = vmatpush.msra.mxu0 0.0
          %642 = vmatpush.msra.mxu0 %v598
          %643 = vmatpush.msra.mxu0 %v597
          %644 = vmatpush.msra.mxu0 %v596
          %645 = vmatpush.msra.mxu0 %v595
          %646 = vmatmul.f32.gmra.mxu0 %v628
          %v647 = vpop.f32.mrf.mxu0
          %v648 = vadd.f32 %v625, %v647
          %649 = vdwg.mxu0
          %s650 = scalar_lea.vmem %s6, 64
          %v651 = vld [vmem:[%s650] sm:$0xff]
          %v652 = vld [vmem:[%s650 + $0x8] sm:$0xff]
          %v653 = vld [vmem:[%s650 + $0x10] sm:$0xff]
          %v654 = vld [vmem:[%s650 + $0x18] sm:$0xff]
          %v656 = vsel %vm565, %v594, 0
          %658 = vmatpush.msra.mxu0 0.0
          %659 = vmatpush.msra.mxu0 0.0
          %660 = vmatpush.msra.mxu0 0.0
          %661 = vmatpush.msra.mxu0 0.0
          %662 = vmatpush.msra.mxu0 0.0
          %663 = vmatpush.msra.mxu0 0.0
          %664 = vmatpush.msra.mxu0 0.0
          %665 = vmatpush.msra.mxu0 0.0
          %666 = vmatpush.msra.mxu0 0.0
          %667 = vmatpush.msra.mxu0 0.0
          %668 = vmatpush.msra.mxu0 0.0
          %669 = vmatpush.msra.mxu0 0.0
          %670 = vmatpush.msra.mxu0 %v654
          %671 = vmatpush.msra.mxu0 %v653
          %672 = vmatpush.msra.mxu0 %v652
          %673 = vmatpush.msra.mxu0 %v651
          %674 = vmatmul.f32.gmra.mxu0 %v656
          %v675 = vpop.f32.mrf.mxu0
          %v676 = vadd.f32 0.0, %v675
          %677 = vdwg.mxu0
          %v678 = vadd.f32 %v648, %v676
          %v679 = vld [vmem:[%s7] sm:$0x1]
          %v681 = vperm.slane %v679, 0
          %v683 = vadd.f32 %v678, %v681
          %v684 = vmax.f32 %v683, 0.0
          %v685 = vld [vmem:[%s8] sm:$0xff]
          %v686 = vld [vmem:[%s8 + $0x8] sm:$0xff]
          %v687 = vld [vmem:[%s8 + $0x10] sm:$0xff]
          %v688 = vld [vmem:[%s8 + $0x18] sm:$0xff]
          %v689 = vld [vmem:[%s8 + $0x20] sm:$0xff]
          %v690 = vld [vmem:[%s8 + $0x28] sm:$0xff]
          %v691 = vld [vmem:[%s8 + $0x30] sm:$0xff]
          %v692 = vld [vmem:[%s8 + $0x38] sm:$0xff]
          %v693 = vld [vmem:[%s8 + $0x40] sm:$0xff]
          %v694 = vld [vmem:[%s8 + $0x48] sm:$0xff]
          %v695 = vld [vmem:[%s8 + $0x50] sm:$0xff]
          %v696 = vld [vmem:[%s8 + $0x58] sm:$0xff]
          %v697 = vld [vmem:[%s8 + $0x60] sm:$0xff]
          %v698 = vld [vmem:[%s8 + $0x68] sm:$0xff]
          %v699 = vld [vmem:[%s8 + $0x70] sm:$0xff]
          %v700 = vld [vmem:[%s8 + $0x78] sm:$0xff]
          %v701 = vld [vmem:[%s9] sm:$0x1]
          %v703 = vperm.slane %v701, 0
          %705 = vmatpush.msra.mxu0 %v700
          %706 = vmatpush.msra.mxu0 %v699
          %707 = vmatpush.msra.mxu0 %v698
          %708 = vmatpush.msra.mxu0 %v697
          %709 = vmatpush.msra.mxu0 %v696
          %710 = vmatpush.msra.mxu0 %v695
          %711 = vmatpush.msra.mxu0 %v694
          %712 = vmatpush.msra.mxu0 %v693
          %713 = vmatpush.msra.mxu0 %v692
          %714 = vmatpush.msra.mxu0 %v691
          %715 = vmatpush.msra.mxu0 %v690
          %716 = vmatpush.msra.mxu0 %v689
          %717 = vmatpush.msra.mxu0 %v688
          %718 = vmatpush.msra.mxu0 %v687
          %719 = vmatpush.msra.mxu0 %v686
          %720 = vmatpush.msra.mxu0 %v685
          %721 = vmatmul.f32.gmra.mxu0 %v684
          %v722 = vpop.f32.mrf.mxu0
          %v723 = vadd.f32 %v703, %v722
          %724 = vdwg.mxu0
          %725 = vst [vmem:[#allocation9] sm:$0xff] %v723
        $region56: #{tpu_custom_call.1} parent=47 // pred_fallthru
          _
        // Predicated region
        $region57: #{tpu_custom_call.1} parent=47 // pred_check
          %p726 = pneg %p299
        $region58: #{tpu_custom_call.1} parent=47 // pred_check_branch
          %728 = sbr.rel (%p726) target = $region60
        $region59: #{tpu_custom_call.1} parent=47 // pred_region
          %730 = vsyncadd [#allocation10], 0
          %s731 = smul.addr %s45, 8
          %s732 = scalar_lea.hbm %s10, %s731
          %s734 = sshll.u32 [#allocation9], 4
          %s735 = int_to_ptr.vmem [resolvable:$true] %s734
          %s736 = sshll.u32 %s732, 4
          %s737 = int_to_ptr.hbm [resolvable:$true] %s736
          %739 = dma.vmem_to_hbm [thread:$0]  %s735, 128, %s737, [#allocation10]
        $region60: #{tpu_custom_call.1} parent=47 // pred_fallthru
          _
        // Predicated region
        $region61: #{tpu_custom_call.1} parent=47 // pred_check
          %p740 = pneg %p299
        $region62: #{tpu_custom_call.1} parent=47 // pred_check_branch
          %742 = sbr.rel (%p740) target = $region64
        $region63: #{tpu_custom_call.1} parent=47 // pred_region
          %744 = dma.done [#allocation10], 128
        $region64: #{tpu_custom_call.1} parent=47 // pred_fallthru
          _
      $region48: #{tpu_custom_call.1} parent=5 // pred_fallthru
        _
      %p745 = scmp.le.s32.totalorder 2, %s35
      // Predicated region
      $region65: #{tpu_custom_call.1} parent=5 // pred_check
        %p746 = pneg %p745
      $region66: #{tpu_custom_call.1} parent=5 // pred_check_branch
        %748 = sbr.rel (%p746) target = $region68
      $region67: #{tpu_custom_call.1} parent=5 // pred_region
        %s749 = ssub.s32 %s35, 2
      $region68: #{tpu_custom_call.1} parent=5 // pred_fallthru
        _
    $region6: #{tpu_custom_call.1} parent=1 // loop_footer
      %s39 = sadd.s32 1, %s35
    $region7: #{tpu_custom_call.1} parent=1 // loop_footer_branch
      %34 = sbr.rel target = $region3
    $region8: #{tpu_custom_call.1} parent=1 // loop_exit
      _
    %750 = vsyncpa [#allocation10], 1
    %s751 = scalar_lea.sflag [#allocation10], 1
    %752 = vsyncpa %s751, 1

</llo_original>
